<compile_context>
chip_gen: v6e
topology: v6e:2x2x1
jax: 0.10.0
libtpu: 0.0.40
codegen_flags: <defaults>
</compile_context>

<pallas_src>
import jax
import jax.numpy as jnp
from jax.experimental import pallas as pl
from jax.experimental.pallas import tpu as pltpu


def _round_up(v, m):
    return ((v + m - 1) // m) * m


def _make_routed_kernel(threshold: float, num_layers: int, inv_count: float):
    def kernel(x_ref, w_ref, b_ref, y_ref, act_ref):
        # Load the model input into the VMEM output once; y_ref is the
        # resident carry for x across all layers (no HBM round-trips).
        y_ref[...] = x_ref[...]

        def layer(l, carry):
            x = y_ref[...]                              # (B, Dp) resident carry

            # activity = mean(|x|) over the REAL (unpadded) elements; padded
            # lanes are guaranteed zero so the sum is unaffected.
            act = jnp.sum(jnp.abs(x)) * inv_count

            # Unconditional scalar SMEM store of this layer's activity
            # (must stay outside the gate so `computed` is correct).
            act_ref[l] = act

            # Routed compute: only touch the MXU / VMEM when the gate is on;
            # routed-off layers leave y_ref (== x) untouched.
            @pl.when(act > threshold)
            def _():
                xw = x.astype(w_ref.dtype)
                out = jnp.dot(xw, w_ref[l], preferred_element_type=jnp.float32)
                y_ref[...] = jnp.maximum(out + b_ref[l], 0.0)

            return carry

        jax.lax.fori_loop(0, num_layers, layer, 0, unroll=True)

    return kernel


def synthetic_routing_forward(x, w_stack, b_stack, threshold,
                              *, weight_dtype=jnp.float32):
    """Forward pass of SyntheticRoutingModel.

    x:       (B, D)    float32
    w_stack: (L, D, D) float32, pre-transposed to (D_in, D_out)
    b_stack: (L, D)    float32
    Returns (y, computed_list, activities).
    """
    B, D = x.shape
    L = w_stack.shape[0]
    Dp = _round_up(D, 128)

    if Dp != D:
        # Zero-pad the feature dim to a lane-dense multiple of 128.  Padded
        # weight rows/cols and bias lanes are zero, so padded activations stay
        # exactly zero through every layer and the activity sum is unaffected.
        x_p = jnp.zeros((B, Dp), x.dtype).at[:, :D].set(x)
        w_p = jnp.zeros((L, Dp, Dp), w_stack.dtype).at[:, :D, :D].set(w_stack)
        b_p = jnp.zeros((L, 1, Dp), b_stack.dtype).at[:, 0, :D].set(b_stack)
    else:
        x_p = x
        w_p = w_stack
        b_p = b_stack.reshape(L, 1, D)

    w_p = w_p.astype(weight_dtype)

    kernel = _make_routed_kernel(float(threshold), L, 1.0 / float(B * D))

    y_p, acts = pl.pallas_call(
        kernel,
        out_shape=(
            jax.ShapeDtypeStruct((B, Dp), jnp.float32),
            jax.ShapeDtypeStruct((L,), jnp.float32),
        ),
        in_specs=[
            pl.BlockSpec(memory_space=pltpu.MemorySpace.VMEM),   # x        (B, Dp)
            pl.BlockSpec(memory_space=pltpu.MemorySpace.VMEM),   # weights  (L, Dp, Dp)
            pl.BlockSpec(memory_space=pltpu.MemorySpace.VMEM),   # bias     (L, 1, Dp)
        ],
        out_specs=(
            pl.BlockSpec(memory_space=pltpu.MemorySpace.VMEM),   # y carry  (B, Dp)
            pl.BlockSpec(memory_space=pltpu.MemorySpace.SMEM),   # activity log (L,)
        ),
    )(x_p, w_p, b_p)

    y = y_p[:, :D] if Dp != D else y_p
    gates = acts > threshold
    computed = [gates[l] for l in range(L)]    # == `computed` list of the module
    return y, computed, acts


def _reference_forward(x, w_stack, b_stack, threshold):
    """Pure-JAX reference mirroring the PyTorch module."""
    L = w_stack.shape[0]
    acts = []
    for l in range(L):
        act = jnp.mean(jnp.abs(x))
        out = jnp.maximum(x @ w_stack[l] + b_stack[l], 0.0)
        x = jnp.where(act > threshold, out, x)
        acts.append(act)
    return x, jnp.stack(acts)


def _run_case(key, B, D, layers, threshold):
    kx, kw, kb = jax.random.split(key, 3)
    bound = 1.0 / float(D) ** 0.5
    # nn.Linear weight is (D_out, D_in); pre-transpose to (D_in, D_out) for x @ W.
    w_pt = jax.random.uniform(kw, (layers, D, D), jnp.float32, -bound, bound)
    w_stack = jnp.transpose(w_pt, (0, 2, 1))
    b_stack = jax.random.uniform(kb, (layers, D), jnp.float32, -bound, bound)
    x = jax.random.normal(kx, (B, D), jnp.float32)

    y, computed, acts = synthetic_routing_forward(x, w_stack, b_stack, threshold)
    y = jax.block_until_ready(y)

    y_ref, acts_ref = _reference_forward(x, w_stack, b_stack, threshold)
    assert jnp.allclose(y, y_ref, atol=1e-5, rtol=1e-5), f"output mismatch (D={D})"
    assert jnp.allclose(acts, acts_ref, atol=1e-5, rtol=1e-5), f"activity mismatch (D={D})"
    assert all(bool(c) == bool(a > threshold) for c, a in zip(computed, acts_ref)), \
        f"routing-decision mismatch (D={D})"


if __name__ == "__main__":
    LAYERS = 3
    THRESHOLD = 0.3
    key = jax.random.PRNGKey(0)
    k1, k2 = jax.random.split(key)

    # Lane-dense case (D already a multiple of 128).
    _run_case(k1, B=8, D=128, layers=LAYERS, threshold=THRESHOLD)
    # Small-D case from the original toy config; exercises the padding path.
    _run_case(k2, B=8, D=32, layers=LAYERS, threshold=THRESHOLD)

    print("KERNEL_OK")
</pallas_src>

<mosaic_0001>
module attributes {stable_mosaic.version = 11 : i64} {
  func.func @kernel(%arg0: memref<8x128xf32, #tpu.memory_space<vmem>>, %arg1: memref<3x128x128xf32, #tpu.memory_space<vmem>>, %arg2: memref<3x1x128xf32, #tpu.memory_space<vmem>>, %arg3: memref<8x128xf32, #tpu.memory_space<vmem>>, %arg4: memref<3xf32, #tpu.memory_space<smem>>) attributes {dimension_semantics = [], scalar_prefetch = 0 : i64, scratch_operands = 0 : i64, tpu.core_type = #tpu.core_type<tc>} {
    %c0 = arith.constant 0 : index
    %c0_0 = arith.constant 0 : index
    %0 = vector.load %arg0[%c0, %c0_0] : memref<8x128xf32, #tpu.memory_space<vmem>>, vector<8x128xf32>
    %c0_1 = arith.constant 0 : index
    %c0_2 = arith.constant 0 : index
    %1 = vector.load %arg3[%c0_1, %c0_2] : memref<8x128xf32, #tpu.memory_space<vmem>>, vector<8x128xf32>
    tpu.vector_store %arg3[%c0_1, %c0_2], %0 {strides = array<i32>} : memref<8x128xf32, #tpu.memory_space<vmem>>, vector<8x128xf32>,
    %c0_i32 = arith.constant 0 : i32
    %c0_3 = arith.constant 0 : index
    %c0_4 = arith.constant 0 : index
    %2 = vector.load %arg3[%c0_3, %c0_4] : memref<8x128xf32, #tpu.memory_space<vmem>>, vector<8x128xf32>
    %3 = math.absf %2 : vector<8x128xf32>
    %4 = vector.shape_cast %3 : vector<8x128xf32> to vector<1x8x128xf32>
    %cst = arith.constant dense<0.000000e+00> : vector<1xf32>
    %5 = vector.multi_reduction <add>, %4, %cst [1, 2] : vector<1x8x128xf32> to vector<1xf32>
    %6 = vector.shape_cast %5 : vector<1xf32> to vector<1x1x1xf32>
    %7 = vector.extract %6[0, 0, 0] : f32 from vector<1x1x1xf32>
    %cst_5 = arith.constant 9.765625E-4 : f32
    %8 = arith.mulf %7, %cst_5 : f32
    %9 = arith.index_cast %c0_i32 : i32 to index
    %10 = memref.load %arg4[%9] : memref<3xf32, #tpu.memory_space<smem>>
    memref.store %8, %arg4[%9] : memref<3xf32, #tpu.memory_space<smem>>
    %cst_6 = arith.constant 3.000000e-01 : f32
    %11 = arith.cmpf ogt, %8, %cst_6 : f32
    %12 = arith.extui %11 : i1 to i32
    %c0_i32_7 = arith.constant 0 : i32
    %13 = arith.cmpi ne, %12, %c0_i32_7 : i32
    scf.if %13 {
      %38 = arith.index_cast %c0_i32 : i32 to index
      %c0_20 = arith.constant 0 : index
      %c0_21 = arith.constant 0 : index
      %39 = vector.load %arg1[%38, %c0_20, %c0_21] : memref<3x128x128xf32, #tpu.memory_space<vmem>>, vector<1x128x128xf32>
      %40 = vector.shape_cast %39 : vector<1x128x128xf32> to vector<128x128xf32>
      %cst_22 = arith.constant dense<0.000000e+00> : vector<8x128xf32>
      %41 = tpu.matmul %2, %40, %cst_22 {dimension_numbers = #tpu.dot_dimension_numbers<[1], [0], [0], [1], [0, 0, 1, 1], [], []>} : vector<8x128xf32>, vector<128x128xf32>, vector<8x128xf32> -> vector<8x128xf32>
      %42 = arith.index_cast %c0_i32 : i32 to index
      %c0_23 = arith.constant 0 : index
      %c0_24 = arith.constant 0 : index
      %43 = vector.load %arg2[%42, %c0_23, %c0_24] : memref<3x1x128xf32, #tpu.memory_space<vmem>>, vector<1x1x128xf32>
      %44 = vector.shape_cast %43 : vector<1x1x128xf32> to vector<1x128xf32>
      %45 = vector.broadcast %44 : vector<1x128xf32> to vector<8x128xf32>
      %46 = arith.addf %41, %45 : vector<8x128xf32>
      %cst_25 = arith.constant 0.000000e+00 : f32
      %47 = vector.broadcast %cst_25 : f32 to vector<8x128xf32>
      %48 = arith.maximumf %46, %47 : vector<8x128xf32>
      %c0_26 = arith.constant 0 : index
      %c0_27 = arith.constant 0 : index
      %49 = vector.load %arg3[%c0_26, %c0_27] : memref<8x128xf32, #tpu.memory_space<vmem>>, vector<8x128xf32>
      tpu.vector_store %arg3[%c0_26, %c0_27], %48 {strides = array<i32>} : memref<8x128xf32, #tpu.memory_space<vmem>>, vector<8x128xf32>,
    } else {
    }
    %c1_i32 = arith.constant 1 : i32
    %c0_8 = arith.constant 0 : index
    %c0_9 = arith.constant 0 : index
    %14 = vector.load %arg3[%c0_8, %c0_9] : memref<8x128xf32, #tpu.memory_space<vmem>>, vector<8x128xf32>
    %15 = math.absf %14 : vector<8x128xf32>
    %16 = vector.shape_cast %15 : vector<8x128xf32> to vector<1x8x128xf32>
    %cst_10 = arith.constant dense<0.000000e+00> : vector<1xf32>
    %17 = vector.multi_reduction <add>, %16, %cst_10 [1, 2] : vector<1x8x128xf32> to vector<1xf32>
    %18 = vector.shape_cast %17 : vector<1xf32> to vector<1x1x1xf32>
    %19 = vector.extract %18[0, 0, 0] : f32 from vector<1x1x1xf32>
    %cst_11 = arith.constant 9.765625E-4 : f32
    %20 = arith.mulf %19, %cst_11 : f32
    %21 = arith.index_cast %c1_i32 : i32 to index
    %22 = memref.load %arg4[%21] : memref<3xf32, #tpu.memory_space<smem>>
    memref.store %20, %arg4[%21] : memref<3xf32, #tpu.memory_space<smem>>
    %cst_12 = arith.constant 3.000000e-01 : f32
    %23 = arith.cmpf ogt, %20, %cst_12 : f32
    %24 = arith.extui %23 : i1 to i32
    %c0_i32_13 = arith.constant 0 : i32
    %25 = arith.cmpi ne, %24, %c0_i32_13 : i32
    scf.if %25 {
      %38 = arith.index_cast %c1_i32 : i32 to index
      %c0_20 = arith.constant 0 : index
      %c0_21 = arith.constant 0 : index
      %39 = vector.load %arg1[%38, %c0_20, %c0_21] : memref<3x128x128xf32, #tpu.memory_space<vmem>>, vector<1x128x128xf32>
      %40 = vector.shape_cast %39 : vector<1x128x128xf32> to vector<128x128xf32>
      %cst_22 = arith.constant dense<0.000000e+00> : vector<8x128xf32>
      %41 = tpu.matmul %14, %40, %cst_22 {dimension_numbers = #tpu.dot_dimension_numbers<[1], [0], [0], [1], [0, 0, 1, 1], [], []>} : vector<8x128xf32>, vector<128x128xf32>, vector<8x128xf32> -> vector<8x128xf32>
      %42 = arith.index_cast %c1_i32 : i32 to index
      %c0_23 = arith.constant 0 : index
      %c0_24 = arith.constant 0 : index
      %43 = vector.load %arg2[%42, %c0_23, %c0_24] : memref<3x1x128xf32, #tpu.memory_space<vmem>>, vector<1x1x128xf32>
      %44 = vector.shape_cast %43 : vector<1x1x128xf32> to vector<1x128xf32>
      %45 = vector.broadcast %44 : vector<1x128xf32> to vector<8x128xf32>
      %46 = arith.addf %41, %45 : vector<8x128xf32>
      %cst_25 = arith.constant 0.000000e+00 : f32
      %47 = vector.broadcast %cst_25 : f32 to vector<8x128xf32>
      %48 = arith.maximumf %46, %47 : vector<8x128xf32>
      %c0_26 = arith.constant 0 : index
      %c0_27 = arith.constant 0 : index
      %49 = vector.load %arg3[%c0_26, %c0_27] : memref<8x128xf32, #tpu.memory_space<vmem>>, vector<8x128xf32>
      tpu.vector_store %arg3[%c0_26, %c0_27], %48 {strides = array<i32>} : memref<8x128xf32, #tpu.memory_space<vmem>>, vector<8x128xf32>,
    } else {
    }
    %c2_i32 = arith.constant 2 : i32
    %c0_14 = arith.constant 0 : index
    %c0_15 = arith.constant 0 : index
    %26 = vector.load %arg3[%c0_14, %c0_15] : memref<8x128xf32, #tpu.memory_space<vmem>>, vector<8x128xf32>
    %27 = math.absf %26 : vector<8x128xf32>
    %28 = vector.shape_cast %27 : vector<8x128xf32> to vector<1x8x128xf32>
    %cst_16 = arith.constant dense<0.000000e+00> : vector<1xf32>
    %29 = vector.multi_reduction <add>, %28, %cst_16 [1, 2] : vector<1x8x128xf32> to vector<1xf32>
    %30 = vector.shape_cast %29 : vector<1xf32> to vector<1x1x1xf32>
    %31 = vector.extract %30[0, 0, 0] : f32 from vector<1x1x1xf32>
    %cst_17 = arith.constant 9.765625E-4 : f32
    %32 = arith.mulf %31, %cst_17 : f32
    %33 = arith.index_cast %c2_i32 : i32 to index
    %34 = memref.load %arg4[%33] : memref<3xf32, #tpu.memory_space<smem>>
    memref.store %32, %arg4[%33] : memref<3xf32, #tpu.memory_space<smem>>
    %cst_18 = arith.constant 3.000000e-01 : f32
    %35 = arith.cmpf ogt, %32, %cst_18 : f32
    %36 = arith.extui %35 : i1 to i32
    %c0_i32_19 = arith.constant 0 : i32
    %37 = arith.cmpi ne, %36, %c0_i32_19 : i32
    scf.if %37 {
      %38 = arith.index_cast %c2_i32 : i32 to index
      %c0_20 = arith.constant 0 : index
      %c0_21 = arith.constant 0 : index
      %39 = vector.load %arg1[%38, %c0_20, %c0_21] : memref<3x128x128xf32, #tpu.memory_space<vmem>>, vector<1x128x128xf32>
      %40 = vector.shape_cast %39 : vector<1x128x128xf32> to vector<128x128xf32>
      %cst_22 = arith.constant dense<0.000000e+00> : vector<8x128xf32>
      %41 = tpu.matmul %26, %40, %cst_22 {dimension_numbers = #tpu.dot_dimension_numbers<[1], [0], [0], [1], [0, 0, 1, 1], [], []>} : vector<8x128xf32>, vector<128x128xf32>, vector<8x128xf32> -> vector<8x128xf32>
      %42 = arith.index_cast %c2_i32 : i32 to index
      %c0_23 = arith.constant 0 : index
      %c0_24 = arith.constant 0 : index
      %43 = vector.load %arg2[%42, %c0_23, %c0_24] : memref<3x1x128xf32, #tpu.memory_space<vmem>>, vector<1x1x128xf32>
      %44 = vector.shape_cast %43 : vector<1x1x128xf32> to vector<1x128xf32>
      %45 = vector.broadcast %44 : vector<1x128xf32> to vector<8x128xf32>
      %46 = arith.addf %41, %45 : vector<8x128xf32>
      %cst_25 = arith.constant 0.000000e+00 : f32
      %47 = vector.broadcast %cst_25 : f32 to vector<8x128xf32>
      %48 = arith.maximumf %46, %47 : vector<8x128xf32>
      %c0_26 = arith.constant 0 : index
      %c0_27 = arith.constant 0 : index
      %49 = vector.load %arg3[%c0_26, %c0_27] : memref<8x128xf32, #tpu.memory_space<vmem>>, vector<8x128xf32>
      tpu.vector_store %arg3[%c0_26, %c0_27], %48 {strides = array<i32>} : memref<8x128xf32, #tpu.memory_space<vmem>>, vector<8x128xf32>,
    } else {
    }
    %c3_i32 = arith.constant 3 : i32
    return
  }
}

</mosaic_0001>

<llo_original>
// kernel: tpu_custom_call.1
$region0: #{tpu_custom_call.1}
  #allocation0 [shape = 'u32[]', space=smem, size = 0x4, offset = 0x4, fixed_abs, tag = 'smem constant byte address 0x4 - core index']
  #allocation1 [shape = 'u32[144,128]{1,0:T(1,128)}', space=vmem, size = 0x12000, scoped, tag = 'internal scratch']
  %s0 = inlined_call_operand.hbm [shape: f32[8,128], index: 0, kind: input, shape index: {}]
  %s1 = inlined_call_operand.hbm [shape: f32[3,128,128], index: 1, kind: input, shape index: {}]
  %s2 = inlined_call_operand.vmem [shape: f32[3,1,128], index: 2, kind: input, shape index: {}]
  %s3 = inlined_call_operand.hbm [shape: f32[8,128], index: 3, kind: output, shape index: {0}]
  %s4 = inlined_call_operand.hbm [shape: f32[3], index: 4, kind: output, shape index: {1}]
  %5 = xla_tuple %s3, %s4
  %s6 = sld [smem:[#allocation0]]
  $region50: #{tpu_custom_call.1} parent=0
    _
  %s8 = ssub.s32 1, %s6
  %s9 = scalar_select 0, %s8, %s6
  $region1: #{tpu_custom_call.1} parent=0
    #allocation2 [shape = 'u8[4096]{0}', space=vmem, size = 0x1000, scoped, tag = 'input window, operand 0, single buffered']
    #allocation3 [shape = 's32[1]{0}', space=sflag, size = 0x4, scoped, tag = 'scoped memory for tpu_custom_call.1']
    #allocation4 [shape = 's32[1]{0}', space=sflag, size = 0x4, scoped, tag = 'scoped memory for tpu_custom_call.1']
    #allocation5 [shape = 's32[1]{0}', space=sflag, size = 0x4, scoped, tag = 'scoped memory for tpu_custom_call.1']
    #allocation6 [shape = 'u8[196608]{0}', space=vmem, size = 0x30000, scoped, tag = 'input window, operand 1, single buffered']
    #allocation7 [shape = 's32[1]{0}', space=sflag, size = 0x4, scoped, tag = 'scoped memory for tpu_custom_call.1']
    #allocation8 [shape = 'u8[4096]{0}', space=vmem, size = 0x1000, scoped, tag = 'output window, operand 0, single buffered']
    #allocation9 [shape = 'u8[512]{0}', space=smem, size = 0x200, scoped, tag = 'output window, operand 1, single buffered']
    %10 = vsyncpa [#allocation3], 0
    %11 = vsyncpa [#allocation7], 0
    %12 = vsyncpa [#allocation4], 0
    %13 = vsyncpa [#allocation5], 0
    // Predicated region
    $region2: #{tpu_custom_call.1} parent=1 // pred_check
      _
    $region3: #{tpu_custom_call.1} parent=1 // pred_check_branch
      %15 = sbr.rel (0) target = $region5
    $region4: #{tpu_custom_call.1} parent=1 // pred_region
      %s17 = ssub.s32 128, 128
      %18 = vsyncadd [#allocation3], %s17
      %s20 = sshll.u32 [#allocation2], 4
      %s21 = int_to_ptr.vmem [resolvable:$true] %s20
      %23 = dma.hbm_to_vmem [thread:$0]  %s0, 128, %s21, [#allocation3]
    $region5: #{tpu_custom_call.1} parent=1 // pred_fallthru
      _
    // Predicated region
    $region6: #{tpu_custom_call.1} parent=1 // pred_check
      _
    $region7: #{tpu_custom_call.1} parent=1 // pred_check_branch
      %25 = sbr.rel (0) target = $region9
    $region8: #{tpu_custom_call.1} parent=1 // pred_region
      %s27 = ssub.s32 6144, 6144
      %28 = vsyncadd [#allocation7], %s27
      %s29 = sshll.u32 [#allocation6], 4
      %s30 = int_to_ptr.vmem [resolvable:$true] %s29
      %35 = dma.hbm_to_vmem [thread:$0]  %s1, 6144, %s30, [#allocation7], 128, 128, 8
    $region9: #{tpu_custom_call.1} parent=1 // pred_fallthru
      _
    // Predicated region
    $region10: #{tpu_custom_call.1} parent=1 // pred_check
      _
    $region11: #{tpu_custom_call.1} parent=1 // pred_check_branch
      %37 = sbr.rel (0) target = $region13
    $region12: #{tpu_custom_call.1} parent=1 // pred_region
      _
    $region13: #{tpu_custom_call.1} parent=1 // pred_fallthru
      _
    // Predicated region
    $region14: #{tpu_custom_call.1} parent=1 // pred_check
      _
    $region15: #{tpu_custom_call.1} parent=1 // pred_check_branch
      %39 = sbr.rel (0) target = $region17
    $region16: #{tpu_custom_call.1} parent=1 // pred_region
      %40 = dma.done [#allocation3], 128
    $region17: #{tpu_custom_call.1} parent=1 // pred_fallthru
      _
    // Predicated region
    $region18: #{tpu_custom_call.1} parent=1 // pred_check
      _
    $region19: #{tpu_custom_call.1} parent=1 // pred_check_branch
      %42 = sbr.rel (0) target = $region21
    $region20: #{tpu_custom_call.1} parent=1 // pred_region
      %43 = dma.done [#allocation7], 6144
    $region21: #{tpu_custom_call.1} parent=1 // pred_fallthru
      _
    %v44 = vld [vmem:[#allocation2] sm:$0xff]
    %45 = vst [vmem:[#allocation8] sm:$0xff] %v44
    %v46 = vld [vmem:[#allocation8] sm:$0xff]
    %v47 = vand.u32 2147483647, %v46
    %48 = vadd.xlane.f32.xlu0 %v47
    %v49 = vpop.xlane.xlu0 %48
    %v50 = vrot.slane %v49, 4
    %v51 = vadd.f32 %v49, %v50
    %v52 = vrot.slane %v51, 2
    %v53 = vadd.f32 %v51, %v52
    %v54 = vrot.slane %v53, 1
    %v55 = vadd.f32 %v53, %v54
    %s56 = vtos %v55
    %s57 = smul.f32 %s56, 0.0009765625
    %s58 = scalar_lea.smem [#allocation9], 0
    %59 = sst [smem:[%s58]] %s57
    %p60 = scmp.gt.f32.partialorder %s57, 0.3
    // Predicated region
    $region22: #{tpu_custom_call.1} parent=1 // pred_check
      %p61 = pneg %p60
    $region23: #{tpu_custom_call.1} parent=1 // pred_check_branch
      %63 = sbr.rel (%p61) target = $region25
    $region24: #{tpu_custom_call.1} parent=1 // pred_region
      %v64 = vld [vmem:[#allocation6] sm:$0xff]
      %v65 = vld [vmem:[#allocation6 + $0x8] sm:$0xff]
      %v66 = vld [vmem:[#allocation6 + $0x10] sm:$0xff]
      %v67 = vld [vmem:[#allocation6 + $0x18] sm:$0xff]
      %v68 = vld [vmem:[#allocation6 + $0x20] sm:$0xff]
      %v69 = vld [vmem:[#allocation6 + $0x28] sm:$0xff]
      %v70 = vld [vmem:[#allocation6 + $0x30] sm:$0xff]
      %v71 = vld [vmem:[#allocation6 + $0x38] sm:$0xff]
      %v72 = vld [vmem:[#allocation6 + $0x40] sm:$0xff]
      %v73 = vld [vmem:[#allocation6 + $0x48] sm:$0xff]
      %v74 = vld [vmem:[#allocation6 + $0x50] sm:$0xff]
      %v75 = vld [vmem:[#allocation6 + $0x58] sm:$0xff]
      %v76 = vld [vmem:[#allocation6 + $0x60] sm:$0xff]
      %v77 = vld [vmem:[#allocation6 + $0x68] sm:$0xff]
      %v78 = vld [vmem:[#allocation6 + $0x70] sm:$0xff]
      %v79 = vld [vmem:[#allocation6 + $0x78] sm:$0xff]
      %v80 = vld [vmem:[%s2] sm:$0x1]
      %v82 = vlaneseq
      %v83 = vshrl.u32 %v82, 7
      %v84 = vsub.s32 0, %v83
      %v85 = vrot.slane %v80, %v84
      %87 = vmatprep.subr.mxu0 0.0
      %88 = vmatpush1.msra.mxu0 %v79
      %89 = vmatprep.subr.mxu0 0.0
      %90 = vmatpush1.msra.mxu0 %v78
      %91 = vmatprep.subr.mxu0 0.0
      %92 = vmatpush1.msra.mxu0 %v77
      %93 = vmatprep.subr.mxu0 0.0
      %94 = vmatpush1.msra.mxu0 %v76
      %95 = vmatprep.subr.mxu0 0.0
      %96 = vmatpush1.msra.mxu0 %v75
      %97 = vmatprep.subr.mxu0 0.0
      %98 = vmatpush1.msra.mxu0 %v74
      %99 = vmatprep.subr.mxu0 0.0
      %100 = vmatpush1.msra.mxu0 %v73
      %101 = vmatprep.subr.mxu0 0.0
      %102 = vmatpush1.msra.mxu0 %v72
      %103 = vmatprep.subr.mxu0 0.0
      %104 = vmatpush1.msra.mxu0 %v71
      %105 = vmatprep.subr.mxu0 0.0
      %106 = vmatpush1.msra.mxu0 %v70
      %107 = vmatprep.subr.mxu0 0.0
      %108 = vmatpush1.msra.mxu0 %v69
      %109 = vmatprep.subr.mxu0 0.0
      %110 = vmatpush1.msra.mxu0 %v68
      %111 = vmatprep.subr.mxu0 0.0
      %112 = vmatpush1.msra.mxu0 %v67
      %113 = vmatprep.subr.mxu0 0.0
      %114 = vmatpush1.msra.mxu0 %v66
      %115 = vmatprep.subr.mxu0 0.0
      %116 = vmatpush1.msra.mxu0 %v65
      %117 = vmatprep.subr.mxu0 0.0
      %118 = vmatpush1.msra.mxu0 %v64
      %119 = vmatprep.subr.mxu0 0.0
      %120 = vmatpush2.msra.mxu0 0.0
      %121 = vmatprep.subr.mxu0 0.0
      %122 = vmatpush2.msra.mxu0 0.0
      %123 = vmatprep.subr.mxu0 0.0
      %124 = vmatpush2.msra.mxu0 0.0
      %125 = vmatprep.subr.mxu0 0.0
      %126 = vmatpush2.msra.mxu0 0.0
      %127 = vmatprep.subr.mxu0 0.0
      %128 = vmatpush2.msra.mxu0 0.0
      %129 = vmatprep.subr.mxu0 0.0
      %130 = vmatpush2.msra.mxu0 0.0
      %131 = vmatprep.subr.mxu0 0.0
      %132 = vmatpush2.msra.mxu0 0.0
      %133 = vmatprep.subr.mxu0 0.0
      %134 = vmatpush2.msra.mxu0 0.0
      %135 = vmatprep.subr.mxu0 0.0
      %136 = vmatpush2.msra.mxu0 0.0
      %137 = vmatprep.subr.mxu0 0.0
      %138 = vmatpush2.msra.mxu0 0.0
      %139 = vmatprep.subr.mxu0 0.0
      %140 = vmatpush2.msra.mxu0 0.0
      %141 = vmatprep.subr.mxu0 0.0
      %142 = vmatpush2.msra.mxu0 0.0
      %143 = vmatprep.subr.mxu0 0.0
      %144 = vmatpush2.msra.mxu0 0.0
      %145 = vmatprep.subr.mxu0 0.0
      %146 = vmatpush2.msra.mxu0 0.0
      %147 = vmatprep.subr.mxu0 0.0
      %148 = vmatpush2.msra.mxu0 0.0
      %149 = vmatprep.subr.mxu0 0.0
      %150 = vmatpush2.msra.mxu0 0.0
      %151 = vmatprep.mubr.f32.mxu0 0.0
      %152 = vmatmul.mubr.f32.gmra.mxu0 %v46
      %v153 = vpop.f32.mrf.mxu0
      %v154 = vadd.f32 %v85, %v153
      %v155 = vpop.f32.mrf.mxu0
      %156 = vdwg.mxu0
      %v157 = vmax.f32 %v154, 0.0
      %158 = vst [vmem:[#allocation8] sm:$0xff] %v157
    $region25: #{tpu_custom_call.1} parent=1 // pred_fallthru
      _
    %v159 = vld [vmem:[#allocation8] sm:$0xff]
    %v160 = vand.u32 2147483647, %v159
    %161 = vadd.xlane.f32.xlu0 %v160
    %v162 = vpop.xlane.xlu0 %161
    %v163 = vrot.slane %v162, 4
    %v164 = vadd.f32 %v162, %v163
    %v165 = vrot.slane %v164, 2
    %v166 = vadd.f32 %v164, %v165
    %v167 = vrot.slane %v166, 1
    %v168 = vadd.f32 %v166, %v167
    %s169 = vtos %v168
    %s170 = smul.f32 %s169, 0.0009765625
    %s171 = scalar_lea.smem [#allocation9], 1
    %172 = sst [smem:[%s171]] %s170
    %p173 = scmp.gt.f32.partialorder %s170, 0.3
    // Predicated region
    $region26: #{tpu_custom_call.1} parent=1 // pred_check
      %p174 = pneg %p173
    $region27: #{tpu_custom_call.1} parent=1 // pred_check_branch
      %176 = sbr.rel (%p174) target = $region29
    $region28: #{tpu_custom_call.1} parent=1 // pred_region
      %s177 = scalar_lea.vmem [#allocation6], 128
      %v178 = vld [vmem:[%s177] sm:$0xff]
      %v179 = vld [vmem:[%s177 + $0x8] sm:$0xff]
      %v180 = vld [vmem:[%s177 + $0x10] sm:$0xff]
      %v181 = vld [vmem:[%s177 + $0x18] sm:$0xff]
      %v182 = vld [vmem:[%s177 + $0x20] sm:$0xff]
      %v183 = vld [vmem:[%s177 + $0x28] sm:$0xff]
      %v184 = vld [vmem:[%s177 + $0x30] sm:$0xff]
      %v185 = vld [vmem:[%s177 + $0x38] sm:$0xff]
      %v186 = vld [vmem:[%s177 + $0x40] sm:$0xff]
      %v187 = vld [vmem:[%s177 + $0x48] sm:$0xff]
      %v188 = vld [vmem:[%s177 + $0x50] sm:$0xff]
      %v189 = vld [vmem:[%s177 + $0x58] sm:$0xff]
      %v190 = vld [vmem:[%s177 + $0x60] sm:$0xff]
      %v191 = vld [vmem:[%s177 + $0x68] sm:$0xff]
      %v192 = vld [vmem:[%s177 + $0x70] sm:$0xff]
      %v193 = vld [vmem:[%s177 + $0x78] sm:$0xff]
      %s194 = scalar_lea.vmem %s2, 1
      %v195 = vld [vmem:[%s194] sm:$0x1]
      %v197 = vlaneseq
      %v198 = vshrl.u32 %v197, 7
      %v199 = vsub.s32 0, %v198
      %v200 = vrot.slane %v195, %v199
      %202 = vmatprep.subr.mxu0 0.0
      %203 = vmatpush1.msra.mxu0 %v193
      %204 = vmatprep.subr.mxu0 0.0
      %205 = vmatpush1.msra.mxu0 %v192
      %206 = vmatprep.subr.mxu0 0.0
      %207 = vmatpush1.msra.mxu0 %v191
      %208 = vmatprep.subr.mxu0 0.0
      %209 = vmatpush1.msra.mxu0 %v190
      %210 = vmatprep.subr.mxu0 0.0
      %211 = vmatpush1.msra.mxu0 %v189
      %212 = vmatprep.subr.mxu0 0.0
      %213 = vmatpush1.msra.mxu0 %v188
      %214 = vmatprep.subr.mxu0 0.0
      %215 = vmatpush1.msra.mxu0 %v187
      %216 = vmatprep.subr.mxu0 0.0
      %217 = vmatpush1.msra.mxu0 %v186
      %218 = vmatprep.subr.mxu0 0.0
      %219 = vmatpush1.msra.mxu0 %v185
      %220 = vmatprep.subr.mxu0 0.0
      %221 = vmatpush1.msra.mxu0 %v184
      %222 = vmatprep.subr.mxu0 0.0
      %223 = vmatpush1.msra.mxu0 %v183
      %224 = vmatprep.subr.mxu0 0.0
      %225 = vmatpush1.msra.mxu0 %v182
      %226 = vmatprep.subr.mxu0 0.0
      %227 = vmatpush1.msra.mxu0 %v181
      %228 = vmatprep.subr.mxu0 0.0
      %229 = vmatpush1.msra.mxu0 %v180
      %230 = vmatprep.subr.mxu0 0.0
      %231 = vmatpush1.msra.mxu0 %v179
      %232 = vmatprep.subr.mxu0 0.0
      %233 = vmatpush1.msra.mxu0 %v178
      %234 = vmatprep.subr.mxu0 0.0
      %235 = vmatpush2.msra.mxu0 0.0
      %236 = vmatprep.subr.mxu0 0.0
      %237 = vmatpush2.msra.mxu0 0.0
      %238 = vmatprep.subr.mxu0 0.0
      %239 = vmatpush2.msra.mxu0 0.0
      %240 = vmatprep.subr.mxu0 0.0
      %241 = vmatpush2.msra.mxu0 0.0
      %242 = vmatprep.subr.mxu0 0.0
      %243 = vmatpush2.msra.mxu0 0.0
      %244 = vmatprep.subr.mxu0 0.0
      %245 = vmatpush2.msra.mxu0 0.0
      %246 = vmatprep.subr.mxu0 0.0
      %247 = vmatpush2.msra.mxu0 0.0
      %248 = vmatprep.subr.mxu0 0.0
      %249 = vmatpush2.msra.mxu0 0.0
      %250 = vmatprep.subr.mxu0 0.0
      %251 = vmatpush2.msra.mxu0 0.0
      %252 = vmatprep.subr.mxu0 0.0
      %253 = vmatpush2.msra.mxu0 0.0
      %254 = vmatprep.subr.mxu0 0.0
      %255 = vmatpush2.msra.mxu0 0.0
      %256 = vmatprep.subr.mxu0 0.0
      %257 = vmatpush2.msra.mxu0 0.0
      %258 = vmatprep.subr.mxu0 0.0
      %259 = vmatpush2.msra.mxu0 0.0
      %260 = vmatprep.subr.mxu0 0.0
      %261 = vmatpush2.msra.mxu0 0.0
      %262 = vmatprep.subr.mxu0 0.0
      %263 = vmatpush2.msra.mxu0 0.0
      %264 = vmatprep.subr.mxu0 0.0
      %265 = vmatpush2.msra.mxu0 0.0
      %266 = vmatprep.mubr.f32.mxu0 0.0
      %267 = vmatmul.mubr.f32.gmra.mxu0 %v159
      %v268 = vpop.f32.mrf.mxu0
      %v269 = vadd.f32 %v200, %v268
      %v270 = vpop.f32.mrf.mxu0
      %271 = vdwg.mxu0
      %v272 = vmax.f32 %v269, 0.0
      %273 = vst [vmem:[#allocation8] sm:$0xff] %v272
    $region29: #{tpu_custom_call.1} parent=1 // pred_fallthru
      _
    %v274 = vld [vmem:[#allocation8] sm:$0xff]
    %v275 = vand.u32 2147483647, %v274
    %276 = vadd.xlane.f32.xlu0 %v275
    %v277 = vpop.xlane.xlu0 %276
    %v278 = vrot.slane %v277, 4
    %v279 = vadd.f32 %v277, %v278
    %v280 = vrot.slane %v279, 2
    %v281 = vadd.f32 %v279, %v280
    %v282 = vrot.slane %v281, 1
    %v283 = vadd.f32 %v281, %v282
    %s284 = vtos %v283
    %s285 = smul.f32 %s284, 0.0009765625
    %s286 = scalar_lea.smem [#allocation9], 2
    %287 = sst [smem:[%s286]] %s285
    %p288 = scmp.gt.f32.partialorder %s285, 0.3
    // Predicated region
    $region30: #{tpu_custom_call.1} parent=1 // pred_check
      %p289 = pneg %p288
    $region31: #{tpu_custom_call.1} parent=1 // pred_check_branch
      %291 = sbr.rel (%p289) target = $region33
    $region32: #{tpu_custom_call.1} parent=1 // pred_region
      %s292 = scalar_lea.vmem [#allocation6], 256
      %v293 = vld [vmem:[%s292] sm:$0xff]
      %v294 = vld [vmem:[%s292 + $0x8] sm:$0xff]
      %v295 = vld [vmem:[%s292 + $0x10] sm:$0xff]
      %v296 = vld [vmem:[%s292 + $0x18] sm:$0xff]
      %v297 = vld [vmem:[%s292 + $0x20] sm:$0xff]
      %v298 = vld [vmem:[%s292 + $0x28] sm:$0xff]
      %v299 = vld [vmem:[%s292 + $0x30] sm:$0xff]
      %v300 = vld [vmem:[%s292 + $0x38] sm:$0xff]
      %v301 = vld [vmem:[%s292 + $0x40] sm:$0xff]
      %v302 = vld [vmem:[%s292 + $0x48] sm:$0xff]
      %v303 = vld [vmem:[%s292 + $0x50] sm:$0xff]
      %v304 = vld [vmem:[%s292 + $0x58] sm:$0xff]
      %v305 = vld [vmem:[%s292 + $0x60] sm:$0xff]
      %v306 = vld [vmem:[%s292 + $0x68] sm:$0xff]
      %v307 = vld [vmem:[%s292 + $0x70] sm:$0xff]
      %v308 = vld [vmem:[%s292 + $0x78] sm:$0xff]
      %s309 = scalar_lea.vmem %s2, 2
      %v310 = vld [vmem:[%s309] sm:$0x1]
      %v312 = vlaneseq
      %v313 = vshrl.u32 %v312, 7
      %v314 = vsub.s32 0, %v313
      %v315 = vrot.slane %v310, %v314
      %317 = vmatprep.subr.mxu0 0.0
      %318 = vmatpush1.msra.mxu0 %v308
      %319 = vmatprep.subr.mxu0 0.0
      %320 = vmatpush1.msra.mxu0 %v307
      %321 = vmatprep.subr.mxu0 0.0
      %322 = vmatpush1.msra.mxu0 %v306
      %323 = vmatprep.subr.mxu0 0.0
      %324 = vmatpush1.msra.mxu0 %v305
      %325 = vmatprep.subr.mxu0 0.0
      %326 = vmatpush1.msra.mxu0 %v304
      %327 = vmatprep.subr.mxu0 0.0
      %328 = vmatpush1.msra.mxu0 %v303
      %329 = vmatprep.subr.mxu0 0.0
      %330 = vmatpush1.msra.mxu0 %v302
      %331 = vmatprep.subr.mxu0 0.0
      %332 = vmatpush1.msra.mxu0 %v301
      %333 = vmatprep.subr.mxu0 0.0
      %334 = vmatpush1.msra.mxu0 %v300
      %335 = vmatprep.subr.mxu0 0.0
      %336 = vmatpush1.msra.mxu0 %v299
      %337 = vmatprep.subr.mxu0 0.0
      %338 = vmatpush1.msra.mxu0 %v298
      %339 = vmatprep.subr.mxu0 0.0
      %340 = vmatpush1.msra.mxu0 %v297
      %341 = vmatprep.subr.mxu0 0.0
      %342 = vmatpush1.msra.mxu0 %v296
      %343 = vmatprep.subr.mxu0 0.0
      %344 = vmatpush1.msra.mxu0 %v295
      %345 = vmatprep.subr.mxu0 0.0
      %346 = vmatpush1.msra.mxu0 %v294
      %347 = vmatprep.subr.mxu0 0.0
      %348 = vmatpush1.msra.mxu0 %v293
      %349 = vmatprep.subr.mxu0 0.0
      %350 = vmatpush2.msra.mxu0 0.0
      %351 = vmatprep.subr.mxu0 0.0
      %352 = vmatpush2.msra.mxu0 0.0
      %353 = vmatprep.subr.mxu0 0.0
      %354 = vmatpush2.msra.mxu0 0.0
      %355 = vmatprep.subr.mxu0 0.0
      %356 = vmatpush2.msra.mxu0 0.0
      %357 = vmatprep.subr.mxu0 0.0
      %358 = vmatpush2.msra.mxu0 0.0
      %359 = vmatprep.subr.mxu0 0.0
      %360 = vmatpush2.msra.mxu0 0.0
      %361 = vmatprep.subr.mxu0 0.0
      %362 = vmatpush2.msra.mxu0 0.0
      %363 = vmatprep.subr.mxu0 0.0
      %364 = vmatpush2.msra.mxu0 0.0
      %365 = vmatprep.subr.mxu0 0.0
      %366 = vmatpush2.msra.mxu0 0.0
      %367 = vmatprep.subr.mxu0 0.0
      %368 = vmatpush2.msra.mxu0 0.0
      %369 = vmatprep.subr.mxu0 0.0
      %370 = vmatpush2.msra.mxu0 0.0
      %371 = vmatprep.subr.mxu0 0.0
      %372 = vmatpush2.msra.mxu0 0.0
      %373 = vmatprep.subr.mxu0 0.0
      %374 = vmatpush2.msra.mxu0 0.0
      %375 = vmatprep.subr.mxu0 0.0
      %376 = vmatpush2.msra.mxu0 0.0
      %377 = vmatprep.subr.mxu0 0.0
      %378 = vmatpush2.msra.mxu0 0.0
      %379 = vmatprep.subr.mxu0 0.0
      %380 = vmatpush2.msra.mxu0 0.0
      %381 = vmatprep.mubr.f32.mxu0 0.0
      %382 = vmatmul.mubr.f32.gmra.mxu0 %v274
      %v383 = vpop.f32.mrf.mxu0
      %v384 = vadd.f32 %v315, %v383
      %v385 = vpop.f32.mrf.mxu0
      %386 = vdwg.mxu0
      %v387 = vmax.f32 %v384, 0.0
      %388 = vst [vmem:[#allocation8] sm:$0xff] %v387
    $region33: #{tpu_custom_call.1} parent=1 // pred_fallthru
      _
    // Predicated region
    $region34: #{tpu_custom_call.1} parent=1 // pred_check
      _
    $region35: #{tpu_custom_call.1} parent=1 // pred_check_branch
      %390 = sbr.rel (0) target = $region37
    $region36: #{tpu_custom_call.1} parent=1 // pred_region
      %s392 = ssub.s32 128, 128
      %393 = vsyncadd [#allocation4], %s392
      %s395 = sshll.u32 [#allocation8], 4
      %s396 = int_to_ptr.vmem [resolvable:$true] %s395
      %398 = dma.vmem_to_hbm [thread:$0]  %s396, 128, %s3, [#allocation4]
    $region37: #{tpu_custom_call.1} parent=1 // pred_fallthru
      _
    // Predicated region
    $region38: #{tpu_custom_call.1} parent=1 // pred_check
      _
    $region39: #{tpu_custom_call.1} parent=1 // pred_check_branch
      %400 = sbr.rel (0) target = $region41
    $region40: #{tpu_custom_call.1} parent=1 // pred_region
      %s402 = ssub.s32 16, 16
      %403 = vsyncadd [#allocation5], %s402
      %406 = dma.smem_to_hbm [#allocation9], 16, %s4, [#allocation5]
    $region41: #{tpu_custom_call.1} parent=1 // pred_fallthru
      _
    // Predicated region
    $region42: #{tpu_custom_call.1} parent=1 // pred_check
      _
    $region43: #{tpu_custom_call.1} parent=1 // pred_check_branch
      %408 = sbr.rel (0) target = $region45
    $region44: #{tpu_custom_call.1} parent=1 // pred_region
      %409 = dma.done [#allocation4], 128
    $region45: #{tpu_custom_call.1} parent=1 // pred_fallthru
      _
    // Predicated region
    $region46: #{tpu_custom_call.1} parent=1 // pred_check
      _
    $region47: #{tpu_custom_call.1} parent=1 // pred_check_branch
      %411 = sbr.rel (0) target = $region49
    $region48: #{tpu_custom_call.1} parent=1 // pred_region
      %412 = dma.done [#allocation5], 16
    $region49: #{tpu_custom_call.1} parent=1 // pred_fallthru
      _
    %413 = sfence
    %414 = vsyncpa [#allocation3], 1
    %415 = vsyncpa [#allocation7], 1
    %416 = vsyncpa [#allocation4], 1
    %417 = vsyncpa [#allocation5], 1

</llo_original>
